<compile_context>
chip_gen: v7x
topology: tpu7x:2x2x1
jax: 0.10.0
libtpu: 0.0.40
codegen_flags: <defaults>
</compile_context>

<pallas_src>
import functools

import jax
import jax.numpy as jnp
from jax.experimental import pallas as pl
from jax.experimental.pallas import tpu as pltpu


def _largest_divisor_leq(n, cap):
    cap = max(1, min(n, cap))
    for d in range(cap, 0, -1):
        if n % d == 0:
            return d
    return 1


def _mask_kernel(m_ref, mb_ref, sum_ref, scr_ref, *, gsize, pad):
    """Per-slab: channel-group sum + bs x bs stride-1 sliding max -> drop counts.

    m_ref:   (1, gsize, H, L*W) int8; L group-tiles packed along lanes, each
             tile already carrying its own zero border of width `pad`.
    mb_ref:  (1, H, L*W) int8 out; counts = gsize - pooled (== mask_block*gsize).
    sum_ref: (1, 1, 1) f32 out; per-slab sum of counts (for the global rescale).
    scr_ref: (H + 2*pad, L*W + 2*pad) f32 scratch for the sliding max.
    """
    H, LW = m_ref.shape[2], m_ref.shape[3]

    # Channel-group SUM (exact small integers in f32); the 1/gsize of the group
    # mean is folded into the final rescale factor instead.
    acc = m_ref[0, 0].astype(jnp.float32)
    for g in range(1, gsize):
        acc = acc + m_ref[0, g].astype(jnp.float32)

    # Zero-bordered scratch.  The extra `pad`-wide frame of zeros reproduces
    # max_pool2d's implicit padding: 0 never beats the true in-window max here
    # because every window contains at least one in-range value >= 0.
    scr_ref[...] = jnp.zeros(scr_ref.shape, scr_ref.dtype)
    scr_ref[pad:pad + H, pad:pad + LW] = acc

    # Separable (2*pad+1) x (2*pad+1) sliding max via statically-offset slices.
    rmax = scr_ref[0:H, :]
    for d in range(1, 2 * pad + 1):
        rmax = jnp.maximum(rmax, scr_ref[d:d + H, :])
    scr_ref[0:H, :] = rmax                      # reuse scratch for the lane pass
    pooled = scr_ref[0:H, 0:LW]
    for d in range(1, 2 * pad + 1):
        pooled = jnp.maximum(pooled, scr_ref[0:H, d:d + LW])

    counts = jnp.float32(gsize) - pooled        # in {0, ..., gsize}, exact
    mb_ref[0] = counts.astype(jnp.int8)
    sum_ref[0] = jnp.sum(counts, keepdims=True)


def _apply_kernel(scale_ref, x_ref, cnt_ref, o_ref):
    """out = x * counts * (numel / (gsize * sum_counts)); f32 math, cast at store."""
    scale = scale_ref[0]
    o_ref[...] = (x_ref[...].astype(jnp.float32)
                  * cnt_ref[...].astype(jnp.float32)
                  * scale).astype(o_ref.dtype)


def dropblock3d_forward(x, *, block_size=5, p=0.1, training=True, key=None,
                        mask=None):
    """DropBlock3D.forward for x of shape (N, C, H, W).

    mask: optional pre-sampled Bernoulli(gamma) mask, shape
          (N, C, H-bs+1, W-bs+1), bool / {0,1}.  If None it is sampled with
          jax.random from `key` (PRNGKey(0) by default).
    """
    if not training:
        return x
    N, C, H, W = x.shape
    assert block_size % 2 == 1, "DropBlock3D requires odd block_size"
    assert H >= block_size and W >= block_size
    pad = block_size // 2
    Hm, Wm = H - block_size + 1, W - block_size + 1

    c_groups = max(1, C // 4)
    gsize = C // c_groups
    # TODO(synk): PyTorch leaves leftover channels (C % max(1, C//4) != 0) with
    # their raw Bernoulli mask; only the evenly-divisible case is implemented.
    assert c_groups * gsize == C, "C must be divisible by max(1, C // 4)"
    G = N * c_groups

    gamma = ((1.0 - p) / block_size ** 2) * (W ** 2 / (W - block_size + 1) ** 2)

    if mask is None:
        if key is None:
            key = jax.random.PRNGKey(0)
        # TODO(synk): sampled with jax.random (not the TPU on-chip PRNG) so the
        # script also runs under the CPU/interpret fallback; not bit-exact to
        # torch.bernoulli but statistically identical.
        mask = jax.random.bernoulli(key, gamma, (N, C, Hm, Wm))
    mask_i8 = mask.astype(jnp.int8)

    # ---- phase 1: lane-packed group mask + pooled drop counts ---------------
    lane_cap = max(1, 128 // W)                           # group tiles per 128 lanes
    cap = lane_cap if G < 2 else min(lane_cap, max(1, G // 2))  # keep >=2 steps (megacore)
    L = _largest_divisor_leq(G, cap)
    n_slabs = G // L
    LW = L * W

    # Layout plumbing on the tiny int8 mask: (N,C,Hm,Wm) -> (n_slabs,gsize,H,L*W)
    # with a per-tile zero border of width `pad` (== F.pad(..., value=0)).
    m = mask_i8.reshape(n_slabs, L, gsize, Hm, Wm)
    m = jnp.pad(m, ((0, 0), (0, 0), (0, 0), (pad, pad), (pad, pad)))
    m = jnp.transpose(m, (0, 2, 3, 1, 4))                 # (n_slabs, gsize, H, L, W)
    m_pack = m.reshape(n_slabs, gsize, H, LW)

    mb_pack, psums = pl.pallas_call(
        functools.partial(_mask_kernel, gsize=gsize, pad=pad),
        grid=(n_slabs,),
        in_specs=[pl.BlockSpec((1, gsize, H, LW), lambda s: (s, 0, 0, 0))],
        out_specs=[
            pl.BlockSpec((1, H, LW), lambda s: (s, 0, 0)),
            pl.BlockSpec((1, 1, 1), lambda s: (s, 0, 0)),
        ],
        out_shape=[
            jax.ShapeDtypeStruct((n_slabs, H, LW), jnp.int8),
            jax.ShapeDtypeStruct((n_slabs, 1, 1), jnp.float32),
        ],
        scratch_shapes=[pltpu.VMEM((H + 2 * pad, LW + 2 * pad), jnp.float32)],
        compiler_params=pltpu.CompilerParams(
            dimension_semantics=("parallel",),
            vmem_limit_bytes=48 * 1024 * 1024,
        ),
    )(m_pack)

    # Global rescale (tiny scalar reduce).  Each group's mask_block is replicated
    # over its gsize channels, so sum(mask_block over (N,C,H,W)) == sum(counts),
    # hence mask_block*scale == counts * numel / (gsize * sum_counts).
    # (All-windows-dropped -> inf, matching PyTorch's divide-by-zero.)
    total_counts = jnp.sum(psums)
    numel = N * C * H * W  # fits f32 exactly for these sizes; use f64 for >2^24 elems
    combined = jnp.float32(numel) / (jnp.float32(gsize) * total_counts)
    combined = combined.reshape(1)

    # ---- phase 2: lane-dense batched elementwise apply ----------------------
    HW = H * W
    x3 = x.reshape(G, gsize, HW)                          # contiguous view
    cnt = (mb_pack.reshape(n_slabs, H, L, W)              # unpack tiny int8 array
           .transpose(0, 2, 1, 3).reshape(G, 1, HW))

    bytes_per_row = gsize * HW * x.dtype.itemsize
    bn_cap = max(1, min(512, (2 * 1024 * 1024) // max(1, bytes_per_row)))
    if G >= 2:
        bn_cap = min(bn_cap, max(1, G // 2))              # >=2 steps for v7x megacore
    Bn = _largest_divisor_leq(G, bn_cap)

    out3 = pl.pallas_call(
        _apply_kernel,
        grid=(G // Bn,),
        in_specs=[
            pl.BlockSpec(memory_space=pltpu.MemorySpace.SMEM),   # scale (1,)
            pl.BlockSpec((Bn, gsize, HW), lambda i: (i, 0, 0)),  # x rows
            pl.BlockSpec((Bn, 1, HW), lambda i: (i, 0, 0)),      # drop counts
        ],
        out_specs=pl.BlockSpec((Bn, gsize, HW), lambda i: (i, 0, 0)),
        out_shape=jax.ShapeDtypeStruct((G, gsize, HW), x.dtype),
        compiler_params=pltpu.CompilerParams(
            dimension_semantics=("parallel",),
            vmem_limit_bytes=48 * 1024 * 1024,
        ),
    )(combined, x3, cnt)
    return out3.reshape(N, C, H, W)


def _dropblock3d_ref(x, mask, block_size):
    """Pure-JAX reference mirroring the PyTorch forward (same mask input)."""
    N, C, H, W = x.shape
    c_groups = max(1, C // 4)
    gsize = C // c_groups
    m = mask
    for i in range(c_groups):
        s, e = gsize * i, gsize * (i + 1)
        m = m.at[:, s:e].set(jnp.mean(m[:, s:e], axis=1, keepdims=True))
    pad = block_size // 2
    mp = jnp.pad(m, ((0, 0), (0, 0), (pad, pad), (pad, pad)))          # F.pad value=0
    mp = jnp.pad(mp, ((0, 0), (0, 0), (pad, pad), (pad, pad)),
                 constant_values=-jnp.inf)                             # pool padding
    pooled = jax.lax.reduce_window(
        mp, -jnp.inf, jax.lax.max,
        (1, 1, block_size, block_size), (1, 1, 1, 1), "VALID")
    mask_block = 1.0 - pooled
    return mask_block * x * (mask_block.size / jnp.sum(mask_block))


if __name__ == "__main__":
    root = jax.random.PRNGKey(0)
    kx, kmask = jax.random.split(root)

    N, C, H, W = 2, 4, 16, 16
    block_size, p = 5, 0.1
    x = jax.random.normal(kx, (N, C, H, W), dtype=jnp.float32)

    # Parity check against a pure-JAX reference, using the same Bernoulli mask.
    gamma = ((1.0 - p) / block_size ** 2) * (W ** 2 / (W - block_size + 1) ** 2)
    Hm, Wm = H - block_size + 1, W - block_size + 1
    mask = jax.random.bernoulli(kmask, gamma, (N, C, Hm, Wm))

    out = dropblock3d_forward(x, block_size=block_size, p=p, training=True,
                              mask=mask)
    out = jax.block_until_ready(out)
    assert out.shape == x.shape and out.dtype == x.dtype
    ref = _dropblock3d_ref(x, mask.astype(jnp.float32), block_size)
    assert jnp.allclose(out, ref, rtol=1e-5, atol=1e-5), "mismatch vs reference"

    # Default path: mask sampled in the wrapper from a PRNG key.
    out2 = dropblock3d_forward(x, block_size=block_size, p=p, training=True,
                               key=jax.random.PRNGKey(1))
    out2 = jax.block_until_ready(out2)
    assert out2.shape == x.shape and bool(jnp.all(jnp.isfinite(out2)))

    # Eval mode is identity.
    assert jnp.array_equal(dropblock3d_forward(x, training=False), x)

    print("KERNEL_OK")
</pallas_src>

<mosaic_0001>
module attributes {stable_mosaic.version = 11 : i64} {
  func.func @_mask_kernel(%arg0: i32, %arg1: memref<1x4x16x16xi8, #tpu.memory_space<vmem>>, %arg2: memref<1x16x16xi8, #tpu.memory_space<vmem>>, %arg3: memref<1x1x1xf32, #tpu.memory_space<vmem>>, %arg4: memref<20x20xf32, #tpu.memory_space<vmem>>) attributes {dimension_semantics = [#tpu.dimension_semantics<parallel>], iteration_bounds = array<i64: 2>, scalar_prefetch = 0 : i64, scratch_operands = 1 : i64, tpu.core_type = #tpu.core_type<tc>, window_params = [{transform_indices = @transform_0, window_bounds = array<i64: 1, 4, 16, 16>}, {transform_indices = @transform_1, window_bounds = array<i64: 1, 16, 16>}, {transform_indices = @transform_2, window_bounds = array<i64: 1, 1, 1>}]} {
    %c0 = arith.constant 0 : index
    %c0_0 = arith.constant 0 : index
    %c0_1 = arith.constant 0 : index
    %c0_2 = arith.constant 0 : index
    %0 = vector.load %arg1[%c0, %c0_0, %c0_1, %c0_2] : memref<1x4x16x16xi8, #tpu.memory_space<vmem>>, vector<1x1x16x16xi8>
    %1 = vector.shape_cast %0 : vector<1x1x16x16xi8> to vector<16x16xi8>
    %2 = arith.sitofp %1 : vector<16x16xi8> to vector<16x16xf32>
    %c0_3 = arith.constant 0 : index
    %c1 = arith.constant 1 : index
    %c0_4 = arith.constant 0 : index
    %c0_5 = arith.constant 0 : index
    %3 = vector.load %arg1[%c0_3, %c1, %c0_4, %c0_5] : memref<1x4x16x16xi8, #tpu.memory_space<vmem>>, vector<1x1x16x16xi8>
    %4 = vector.shape_cast %3 : vector<1x1x16x16xi8> to vector<16x16xi8>
    %5 = arith.sitofp %4 : vector<16x16xi8> to vector<16x16xf32>
    %6 = arith.addf %2, %5 : vector<16x16xf32>
    %c0_6 = arith.constant 0 : index
    %c2 = arith.constant 2 : index
    %c0_7 = arith.constant 0 : index
    %c0_8 = arith.constant 0 : index
    %7 = vector.load %arg1[%c0_6, %c2, %c0_7, %c0_8] : memref<1x4x16x16xi8, #tpu.memory_space<vmem>>, vector<1x1x16x16xi8>
    %8 = vector.shape_cast %7 : vector<1x1x16x16xi8> to vector<16x16xi8>
    %9 = arith.sitofp %8 : vector<16x16xi8> to vector<16x16xf32>
    %10 = arith.addf %6, %9 : vector<16x16xf32>
    %c0_9 = arith.constant 0 : index
    %c3 = arith.constant 3 : index
    %c0_10 = arith.constant 0 : index
    %c0_11 = arith.constant 0 : index
    %11 = vector.load %arg1[%c0_9, %c3, %c0_10, %c0_11] : memref<1x4x16x16xi8, #tpu.memory_space<vmem>>, vector<1x1x16x16xi8>
    %12 = vector.shape_cast %11 : vector<1x1x16x16xi8> to vector<16x16xi8>
    %13 = arith.sitofp %12 : vector<16x16xi8> to vector<16x16xf32>
    %14 = arith.addf %10, %13 : vector<16x16xf32>
    %cst = arith.constant 0.000000e+00 : f32
    %15 = vector.broadcast %cst : f32 to vector<20x20xf32>
    %c0_12 = arith.constant 0 : index
    %c0_13 = arith.constant 0 : index
    %16 = vector.load %arg4[%c0_12, %c0_13] : memref<20x20xf32, #tpu.memory_space<vmem>>, vector<20x20xf32>
    tpu.vector_store %arg4[%c0_12, %c0_13], %15 {strides = array<i32>} : memref<20x20xf32, #tpu.memory_space<vmem>>, vector<20x20xf32>,
    %c2_14 = arith.constant 2 : index
    %c2_15 = arith.constant 2 : index
    %17 = vector.load %arg4[%c2_14, %c2_15] : memref<20x20xf32, #tpu.memory_space<vmem>>, vector<16x16xf32>
    tpu.vector_store %arg4[%c2_14, %c2_15], %14 {strides = array<i32>} : memref<20x20xf32, #tpu.memory_space<vmem>>, vector<16x16xf32>,
    %c0_16 = arith.constant 0 : index
    %c0_17 = arith.constant 0 : index
    %18 = vector.load %arg4[%c0_16, %c0_17] : memref<20x20xf32, #tpu.memory_space<vmem>>, vector<16x20xf32>
    %c1_18 = arith.constant 1 : index
    %c0_19 = arith.constant 0 : index
    %19 = vector.load %arg4[%c1_18, %c0_19] : memref<20x20xf32, #tpu.memory_space<vmem>>, vector<16x20xf32>
    %20 = arith.maximumf %18, %19 : vector<16x20xf32>
    %c2_20 = arith.constant 2 : index
    %c0_21 = arith.constant 0 : index
    %21 = vector.load %arg4[%c2_20, %c0_21] : memref<20x20xf32, #tpu.memory_space<vmem>>, vector<16x20xf32>
    %22 = arith.maximumf %20, %21 : vector<16x20xf32>
    %c3_22 = arith.constant 3 : index
    %c0_23 = arith.constant 0 : index
    %23 = vector.load %arg4[%c3_22, %c0_23] : memref<20x20xf32, #tpu.memory_space<vmem>>, vector<16x20xf32>
    %24 = arith.maximumf %22, %23 : vector<16x20xf32>
    %c4 = arith.constant 4 : index
    %c0_24 = arith.constant 0 : index
    %25 = vector.load %arg4[%c4, %c0_24] : memref<20x20xf32, #tpu.memory_space<vmem>>, vector<16x20xf32>
    %26 = arith.maximumf %24, %25 : vector<16x20xf32>
    %c0_25 = arith.constant 0 : index
    %c0_26 = arith.constant 0 : index
    %27 = vector.load %arg4[%c0_25, %c0_26] : memref<20x20xf32, #tpu.memory_space<vmem>>, vector<16x20xf32>
    tpu.vector_store %arg4[%c0_25, %c0_26], %26 {strides = array<i32>} : memref<20x20xf32, #tpu.memory_space<vmem>>, vector<16x20xf32>,
    %c0_27 = arith.constant 0 : index
    %c0_28 = arith.constant 0 : index
    %28 = vector.load %arg4[%c0_27, %c0_28] : memref<20x20xf32, #tpu.memory_space<vmem>>, vector<16x16xf32>
    %c0_29 = arith.constant 0 : index
    %c1_30 = arith.constant 1 : index
    %29 = vector.load %arg4[%c0_29, %c1_30] : memref<20x20xf32, #tpu.memory_space<vmem>>, vector<16x16xf32>
    %30 = arith.maximumf %28, %29 : vector<16x16xf32>
    %c0_31 = arith.constant 0 : index
    %c2_32 = arith.constant 2 : index
    %31 = vector.load %arg4[%c0_31, %c2_32] : memref<20x20xf32, #tpu.memory_space<vmem>>, vector<16x16xf32>
    %32 = arith.maximumf %30, %31 : vector<16x16xf32>
    %c0_33 = arith.constant 0 : index
    %c3_34 = arith.constant 3 : index
    %33 = vector.load %arg4[%c0_33, %c3_34] : memref<20x20xf32, #tpu.memory_space<vmem>>, vector<16x16xf32>
    %34 = arith.maximumf %32, %33 : vector<16x16xf32>
    %c0_35 = arith.constant 0 : index
    %c4_36 = arith.constant 4 : index
    %35 = vector.load %arg4[%c0_35, %c4_36] : memref<20x20xf32, #tpu.memory_space<vmem>>, vector<16x16xf32>
    %36 = arith.maximumf %34, %35 : vector<16x16xf32>
    %cst_37 = arith.constant 4.000000e+00 : f32
    %37 = vector.broadcast %cst_37 : f32 to vector<16x16xf32>
    %38 = arith.subf %37, %36 : vector<16x16xf32>
    %39 = arith.fptosi %38 : vector<16x16xf32> to vector<16x16xi8>
    %c0_38 = arith.constant 0 : index
    %c0_39 = arith.constant 0 : index
    %c0_40 = arith.constant 0 : index
    %40 = vector.load %arg2[%c0_38, %c0_39, %c0_40] : memref<1x16x16xi8, #tpu.memory_space<vmem>>, vector<1x16x16xi8>
    %41 = vector.shape_cast %40 : vector<1x16x16xi8> to vector<16x16xi8>
    %42 = vector.shape_cast %39 : vector<16x16xi8> to vector<1x16x16xi8>
    tpu.vector_store %arg2[%c0_38, %c0_39, %c0_40], %42 {strides = array<i32>} : memref<1x16x16xi8, #tpu.memory_space<vmem>>, vector<1x16x16xi8>,
    %43 = vector.shape_cast %38 : vector<16x16xf32> to vector<1x16x16xf32>
    %cst_41 = arith.constant dense<0.000000e+00> : vector<1xf32>
    %44 = vector.multi_reduction <add>, %43, %cst_41 [1, 2] : vector<1x16x16xf32> to vector<1xf32>
    %45 = vector.shape_cast %44 : vector<1xf32> to vector<1x1x1xf32>
    %46 = vector.extract %45[0, 0, 0] : f32 from vector<1x1x1xf32>
    %47 = vector.broadcast %46 : f32 to vector<1x1xf32>
    %c0_42 = arith.constant 0 : index
    %c0_43 = arith.constant 0 : index
    %c0_44 = arith.constant 0 : index
    %48 = vector.load %arg3[%c0_42, %c0_43, %c0_44] : memref<1x1x1xf32, #tpu.memory_space<vmem>>, vector<1x1x1xf32>
    %49 = vector.shape_cast %48 : vector<1x1x1xf32> to vector<1x1xf32>
    %50 = vector.shape_cast %47 : vector<1x1xf32> to vector<1x1x1xf32>
    tpu.vector_store %arg3[%c0_42, %c0_43, %c0_44], %50 {strides = array<i32>} : memref<1x1x1xf32, #tpu.memory_space<vmem>>, vector<1x1x1xf32>,
    return
  }
  func.func @transform_0(%arg0: i32) -> (i32, i32, i32, i32) {
    %c0_i32 = arith.constant 0 : i32
    %c0_i32_0 = arith.constant 0 : i32
    %c0_i32_1 = arith.constant 0 : i32
    %c0_i32_2 = arith.constant 0 : i32
    return %arg0, %c0_i32, %c0_i32_0, %c0_i32_1 : i32, i32, i32, i32
  }
  func.func @transform_1(%arg0: i32) -> (i32, i32, i32) {
    %c0_i32 = arith.constant 0 : i32
    %c0_i32_0 = arith.constant 0 : i32
    %c0_i32_1 = arith.constant 0 : i32
    return %arg0, %c0_i32, %c0_i32_0 : i32, i32, i32
  }
  func.func @transform_2(%arg0: i32) -> (i32, i32, i32) {
    %c0_i32 = arith.constant 0 : i32
    %c0_i32_0 = arith.constant 0 : i32
    %c0_i32_1 = arith.constant 0 : i32
    return %arg0, %c0_i32, %c0_i32_0 : i32, i32, i32
  }
}

</mosaic_0001>

<llo_original>
// kernel: tpu_custom_call.1
$region0: #{tpu_custom_call.1}
  #allocation0 [shape = 'u32[]', space=smem, size = 0x4, offset = 0x4, fixed_abs, tag = 'smem constant byte address 0x4 - core index']
  #allocation1 [shape = 'u32[144,128]{1,0:T(1,128)}', space=vmem, size = 0x12000, scoped, tag = 'internal scratch']
  #allocation2 [shape = 'f32[20,20]{1,0:T(8,128)}', space=vmem, size = 0x3000, scoped, tag = 'scratch operand']
  %s0 = inlined_call_operand.hbm [shape: s8[2,4,16,16], index: 0, kind: input, shape index: {}]
  %s1 = inlined_call_operand.hbm [shape: s8[2,16,16], index: 1, kind: output, shape index: {0}]
  %s2 = inlined_call_operand.vmem [shape: f32[2,1,1], index: 2, kind: output, shape index: {1}]
  %3 = xla_tuple %s1, %s2
  %s4 = sld [smem:[#allocation0]]
  $region49: #{tpu_custom_call.1} parent=0
    _
  %s6 = ssub.s32 1, %s4
  %s7 = scalar_select 0, %s6, %s4
  $region1: #{tpu_custom_call.1} parent=0
    #allocation3 [shape = 'u8[16384]{0}', space=vmem, size = 0x4000, scoped, tag = 'input window, operand 0']
    #allocation4 [shape = 's32[2]{0}', space=sflag, size = 0x8, scoped, tag = 'scoped memory for tpu_custom_call.1']
    #allocation5 [shape = 's32[2]{0}', space=sflag, size = 0x8, scoped, tag = 'scoped memory for tpu_custom_call.1']
    #allocation6 [shape = 'u8[4096]{0}', space=vmem, size = 0x1000, scoped, tag = 'output window, operand 0']
    %8 = vsyncpa [#allocation4], 0
    %s9 = scalar_lea.sflag [#allocation4], 1
    %10 = vsyncpa %s9, 0
    %11 = vsyncpa [#allocation5], 0
    %s12 = scalar_lea.sflag [#allocation5], 1
    %13 = vsyncpa %s12, 0
    loop: start=0, step=1, limit=4
    $region2: #{tpu_custom_call.1} parent=1 // loop_pre_header
      _
    $region3: #{tpu_custom_call.1} parent=1 // loop_header
      %s15 = sphi 0, %s19
      %p16 = scmp.ge.s32.totalorder %s15, 4
      %s25 = sphi 0, %s27
      %s28 = sphi 0, %s25
      %s29 = sphi 0, %s28
      %s45 = sphi 0, %s29
      %s51 = sphi 0, %s53
      %s54 = sphi 0, %s51
      %s55 = sphi 0, %s54
      %s71 = sphi 0, %s55
      %s77 = sphi 0, %s79
      %s80 = sphi 0, %s77
      %s81 = sphi 0, %s80
      %s97 = sphi 0, %s81
    $region4: #{tpu_custom_call.1} parent=1 // loop_header_branch
      %18 = sbr.rel (%p16) target = $region8
    $region5: #{tpu_custom_call.1} parent=1 // loop_body
      %s20 = ssub.s32 %s15, 1
      %s21 = ssub.s32 %s15, 2
      %s22 = sadd.s32 %s15, 1
      %s23 = ssub.s32 %s15, %s22
      %p24 = scmp.eq.s32.totalorder %s23, 0
      %s26 = sadd.s32 %s25, 1
      %s27 = scalar_select %p24, %s25, %s26
      %p30 = pneg %p24
      %p31 = scmp.eq.s32.totalorder %s15, 1
      %p32 = por %p30, %p31
      %p33 = scmp.ne.s32.totalorder %s25, %s28
      %p34 = scmp.eq.s32.totalorder %s15, 0
      %p35 = por %p33, %p34
      %p36 = scmp.ne.s32.totalorder %s25, %s28
      %p37 = scmp.eq.s32.totalorder %s20, 1
      %p38 = por %p36, %p37
      %p39 = scmp.ne.s32.totalorder %s28, %s29
      %p40 = scmp.eq.s32.totalorder %s20, 0
      %p41 = por %p39, %p40
      %p42 = scmp.ne.s32.totalorder %s28, %s29
      %p43 = scmp.eq.s32.totalorder %s21, 1
      %p44 = por %p42, %p43
      %p46 = scmp.ne.s32.totalorder %s29, %s45
      %p47 = scmp.eq.s32.totalorder %s21, 0
      %p48 = por %p46, %p47
      %s49 = ssub.s32 %s15, %s22
      %p50 = scmp.eq.s32.totalorder %s49, 0
      %s52 = sadd.s32 %s51, 1
      %s53 = scalar_select %p50, %s51, %s52
      %p56 = pneg %p50
      %p57 = scmp.eq.s32.totalorder %s15, 1
      %p58 = por %p56, %p57
      %p59 = scmp.ne.s32.totalorder %s51, %s54
      %p60 = scmp.eq.s32.totalorder %s15, 0
      %p61 = por %p59, %p60
      %p62 = scmp.ne.s32.totalorder %s51, %s54
      %p63 = scmp.eq.s32.totalorder %s20, 1
      %p64 = por %p62, %p63
      %p65 = scmp.ne.s32.totalorder %s54, %s55
      %p66 = scmp.eq.s32.totalorder %s20, 0
      %p67 = por %p65, %p66
      %p68 = scmp.ne.s32.totalorder %s54, %s55
      %p69 = scmp.eq.s32.totalorder %s21, 1
      %p70 = por %p68, %p69
      %p72 = scmp.ne.s32.totalorder %s55, %s71
      %p73 = scmp.eq.s32.totalorder %s21, 0
      %p74 = por %p72, %p73
      %s75 = ssub.s32 %s15, %s22
      %p76 = scmp.eq.s32.totalorder %s75, 0
      %s78 = sadd.s32 %s77, 1
      %s79 = scalar_select %p76, %s77, %s78
      %p82 = pneg %p76
      %p83 = scmp.eq.s32.totalorder %s15, 1
      %p84 = por %p82, %p83
      %p85 = scmp.ne.s32.totalorder %s77, %s80
      %p86 = scmp.eq.s32.totalorder %s15, 0
      %p87 = por %p85, %p86
      %p88 = scmp.ne.s32.totalorder %s77, %s80
      %p89 = scmp.eq.s32.totalorder %s20, 1
      %p90 = por %p88, %p89
      %p91 = scmp.ne.s32.totalorder %s80, %s81
      %p92 = scmp.eq.s32.totalorder %s20, 0
      %p93 = por %p91, %p92
      %p94 = scmp.ne.s32.totalorder %s80, %s81
      %p95 = scmp.eq.s32.totalorder %s21, 1
      %p96 = por %p94, %p95
      %p98 = scmp.ne.s32.totalorder %s81, %s97
      %p99 = scmp.eq.s32.totalorder %s21, 0
      %p100 = por %p98, %p99
      %p101 = scmp.le.s32.totalorder 1, %s15
      %p102 = scmp.lt.s32.totalorder %s15, 3
      %p103 = pnand %p101, %p102
      %p104 = pneg %p103
      // Predicated region
      $region9: #{tpu_custom_call.1} parent=5 // pred_check
        _
      $region10: #{tpu_custom_call.1} parent=5 // pred_check_branch
        %106 = sbr.rel (%p103) target = $region12
      $region11: #{tpu_custom_call.1} parent=5 // pred_region
        %s107 = ssub.s32 %s15, 1
      $region12: #{tpu_custom_call.1} parent=5 // pred_fallthru
        _
      %p108 = scmp.lt.s32.totalorder %s15, 2
      // Predicated region
      $region13: #{tpu_custom_call.1} parent=5 // pred_check
        %p109 = pneg %p108
      $region14: #{tpu_custom_call.1} parent=5 // pred_check_branch
        %111 = sbr.rel (%p109) target = $region16
      $region15: #{tpu_custom_call.1} parent=5 // pred_region
        // Predicated region
        $region17: #{tpu_custom_call.1} parent=15 // pred_check
          %p112 = pneg %p35
        $region18: #{tpu_custom_call.1} parent=15 // pred_check_branch
          %114 = sbr.rel (%p112) target = $region20
        $region19: #{tpu_custom_call.1} parent=15 // pred_region
          %s115 = sand.u32 %s25, 1
          %s116 = scalar_lea.sflag [#allocation4], %s115
          %s117 = sand.u32 %s25, 1
          %s118 = smul.addr %s117, 16
          %s119 = scalar_lea.vmem [#allocation3], %s118
          %s121 = ssub.s32 256, 256
          %122 = vsyncadd %s116, %s121
          %s123 = smul.addr %s15, 8
          %s124 = smul.addr %s123, 32
          %s125 = scalar_lea.hbm %s0, %s124
          %s126 = sshll.u32 %s119, 4
          %s127 = int_to_ptr.vmem [resolvable:$true] %s126
          %132 = dma.hbm_to_vmem [thread:$0]  %s125, 256, %s127, %s116, 32, 32, 2
        $region20: #{tpu_custom_call.1} parent=15 // pred_fallthru
          _
      $region16: #{tpu_custom_call.1} parent=5 // pred_fallthru
        _
      %p133 = scmp.le.s32.totalorder 1, %s15
      %p134 = scmp.lt.s32.totalorder %s15, 3
      %p135 = pnand %p133, %p134
      %p136 = pneg %p135
      // Predicated region
      $region21: #{tpu_custom_call.1} parent=5 // pred_check
        _
      $region22: #{tpu_custom_call.1} parent=5 // pred_check_branch
        %138 = sbr.rel (%p135) target = $region24
      $region23: #{tpu_custom_call.1} parent=5 // pred_region
        %s139 = ssub.s32 %s15, 1
        %s140 = sand.u32 %s28, 1
        %s141 = scalar_lea.sflag [#allocation4], %s140
        %s142 = sand.u32 %s28, 1
        %s143 = smul.addr %s142, 16
        %s144 = scalar_lea.vmem [#allocation3], %s143
        // Predicated region
        $region25: #{tpu_custom_call.1} parent=23 // pred_check
          %p145 = pneg %p41
        $region26: #{tpu_custom_call.1} parent=23 // pred_check_branch
          %147 = sbr.rel (%p145) target = $region28
        $region27: #{tpu_custom_call.1} parent=23 // pred_region
          %148 = dma.done %s141, 256
        $region28: #{tpu_custom_call.1} parent=23 // pred_fallthru
          _
        %s149 = sand.u32 %s28, 1
        %s150 = scalar_lea.sflag [#allocation4], %s149
        %s151 = sand.u32 %s28, 1
        %s152 = smul.addr %s151, 16
        %s153 = scalar_lea.vmem [#allocation3], %s152
        %p154 = pneg %p41
        %p155 = pneg %p38
        %p156 = pneg %p67
        %p157 = pneg %p64
        %s158 = sand.u32 %s54, 1
        %s159 = scalar_lea.sflag [#allocation5], %s158
        %s160 = sand.u32 %s54, 1
        %s161 = smul.addr %s160, 4
        %s162 = scalar_lea.vmem [#allocation6], %s161
        %p163 = pneg %p93
        %p164 = pneg %p90
        %p165 = scmp.lt.s32.totalorder %s20, 1
        %s166 = scalar_select %p165, %s20, 1
        %s167 = scalar_lea.vmem %s2, %s166
        %p168 = scmp.lt.s32.totalorder %s20, 1
        %s169 = scalar_select %p168, %s20, 1
        %s170 = scalar_lea.vmem %s2, %s169
        %v171 = vld [vmem:[%s144] sm:$0x3]
        %v172 = vld [vmem:[%s144 + $0x2] sm:$0x3]
        %v173 = vunpack.c.0.s8 %v171
        %v174 = vunpack.c.0.s8 %v172
        %v175 = vcvt.s32.f32 %v173
        %v176 = vcvt.s32.f32 %v174
        %s177 = scalar_lea.vmem %s144, 4 [#allocation3]
        %v178 = vld [vmem:[%s177] sm:$0x3]
        %v179 = vld [vmem:[%s177 + $0x2] sm:$0x3]
        %v180 = vunpack.c.0.s8 %v178
        %v181 = vunpack.c.0.s8 %v179
        %v182 = vcvt.s32.f32 %v180
        %v183 = vcvt.s32.f32 %v181
        %v184 = vadd.f32 %v175, %v182
        %v185 = vadd.f32 %v176, %v183
        %s186 = scalar_lea.vmem %s144, 8 [#allocation3]
        %v187 = vld [vmem:[%s186] sm:$0x3]
        %v188 = vld [vmem:[%s186 + $0x2] sm:$0x3]
        %v189 = vunpack.c.0.s8 %v187
        %v190 = vunpack.c.0.s8 %v188
        %v191 = vcvt.s32.f32 %v189
        %v192 = vcvt.s32.f32 %v190
        %v193 = vadd.f32 %v184, %v191
        %v194 = vadd.f32 %v185, %v192
        %s195 = scalar_lea.vmem %s144, 12 [#allocation3]
        %v196 = vld [vmem:[%s195] sm:$0x3]
        %v197 = vld [vmem:[%s195 + $0x2] sm:$0x3]
        %v198 = vunpack.c.0.s8 %v196
        %v199 = vunpack.c.0.s8 %v197
        %v200 = vcvt.s32.f32 %v198
        %v201 = vcvt.s32.f32 %v199
        %v202 = vadd.f32 %v193, %v200
        %v203 = vadd.f32 %v194, %v201
        %vm204 = vcmask 162816
        %205 = vst.msk [vmem:[#allocation2] sm:$0xff] %vm204, 0.0
        %206 = vst.msk [vmem:[#allocation2 + $0x8] sm:$0xff] %vm204, 0.0
        %vm207 = vcmask 158720
        %208 = vst.msk [vmem:[#allocation2 + $0x10] sm:$0xf] %vm207, 0.0
        %211 = vrot.lane.b32.xlu0 %v202, 2
        %v212 = vpop.permute.xlu0 %211
        %213 = vrot.lane.b32.xlu0 %v203, 2
        %v214 = vpop.permute.xlu0 %213
        %vm217 = vcmask 146448
        %218 = vst.msk [vmem:[#allocation2 + $0x2] sm:$0xff] %vm217, %v212
        %219 = vst.msk [vmem:[#allocation2 + $0xa] sm:$0xff] %vm217, %v214
        %v220 = vld [vmem:[#allocation2] sm:$0xff]
        %v221 = vld [vmem:[#allocation2 + $0x8] sm:$0xff]
        %v222 = vld [vmem:[#allocation2 + $0x1] sm:$0xff]
        %v223 = vld [vmem:[#allocation2 + $0x9] sm:$0xff]
        %v224 = vmax.f32 %v220, %v222
        %v225 = vmax.f32 %v221, %v223
        %v226 = vld [vmem:[#allocation2 + $0x2] sm:$0xff]
        %v227 = vld [vmem:[#allocation2 + $0xa] sm:$0xff]
        %v228 = vmax.f32 %v224, %v226
        %v229 = vmax.f32 %v225, %v227
        %v230 = vld [vmem:[#allocation2 + $0x3] sm:$0xff]
        %v231 = vld [vmem:[#allocation2 + $0xb] sm:$0xff]
        %v232 = vmax.f32 %v228, %v230
        %v233 = vmax.f32 %v229, %v231
        %v234 = vld [vmem:[#allocation2 + $0x4] sm:$0xff]
        %v235 = vld [vmem:[#allocation2 + $0xc] sm:$0xff]
        %v236 = vmax.f32 %v232, %v234
        %v237 = vmax.f32 %v233, %v235
        %238 = vst.msk [vmem:[#allocation2] sm:$0xff] %vm204, %v236
        %239 = vst.msk [vmem:[#allocation2 + $0x8] sm:$0xff] %vm204, %v237
        %v240 = vld [vmem:[#allocation2] sm:$0xff]
        %v241 = vld [vmem:[#allocation2 + $0x8] sm:$0xff]
        %244 = vrot.lane.b32.xlu0 %v240, 127
        %v245 = vpop.permute.xlu0 %244
        %246 = vrot.lane.b32.xlu0 %v241, 127
        %v247 = vpop.permute.xlu0 %246
        %v250 = vmax.f32 %v240, %v245
        %v251 = vmax.f32 %v241, %v247
        %252 = vrot.lane.b32.xlu0 %v240, 126
        %v253 = vpop.permute.xlu0 %252
        %254 = vrot.lane.b32.xlu0 %v241, 126
        %v255 = vpop.permute.xlu0 %254
        %v258 = vmax.f32 %v250, %v253
        %v259 = vmax.f32 %v251, %v255
        %260 = vrot.lane.b32.xlu0 %v240, 125
        %v261 = vpop.permute.xlu0 %260
        %262 = vrot.lane.b32.xlu0 %v241, 125
        %v263 = vpop.permute.xlu0 %262
        %v266 = vmax.f32 %v258, %v261
        %v267 = vmax.f32 %v259, %v263
        %268 = vrot.lane.b32.xlu0 %v240, 124
        %v269 = vpop.permute.xlu0 %268
        %270 = vrot.lane.b32.xlu0 %v241, 124
        %v271 = vpop.permute.xlu0 %270
        %v274 = vmax.f32 %v266, %v269
        %v275 = vmax.f32 %v267, %v271
        %v276 = vsub.f32 4.0, %v274
        %v277 = vsub.f32 4.0, %v275
        %v278 = vtrunc.f32 %v276
        %v279 = vtrunc.f32 %v277
        %v280 = vpack.c.f32.eXmY %v278, %v279, 312
        %v284 = vpack.c.b8 %v280, %v280
        %v286 = vunpack.c.0.s8 %v284
        %v287 = vunpack.c.1.s8 %v284
        %v288 = vpack.c.b16 %v286, %v286
        %v289 = vpack.c.b8 %v288, %v288
        %v290 = vpack.c.b16 %v287, %v287
        %v291 = vpack.c.b8 %v290, %v290
        %vm292 = vcmask 123904
        %293 = vst.msk [vmem:[%s162] sm:$0x3] %vm292, %v289
        %294 = vst.msk [vmem:[%s162 + $0x2] sm:$0x3] %vm292, %v291
        %vm295 = vcmask 130048
        %v296 = vsel %vm295, %v276, 0.0
        %v297 = vsel %vm295, %v277, 0.0
        %v298 = vadd.f32 %v296, %v297
        %299 = vadd.xlane.f32.xlu0 %v298
        %v300 = vpop.xlane.xlu0 %299
        %v301 = vrot.slane %v300, 4
        %v302 = vadd.f32 %v300, %v301
        %v303 = vrot.slane %v302, 2
        %v304 = vadd.f32 %v302, %v303
        %v305 = vrot.slane %v304, 1
        %v306 = vadd.f32 %v304, %v305
        %s307 = vtos %v306
        %v308 = vstv %s307
        %vm309 = vcmask 0
        %310 = vst.msk [vmem:[%s170] sm:$0x1] %vm309, %v308
        %s311 = sand.u32 %s54, 1
        %s312 = scalar_lea.sflag [#allocation5], %s311
        %s313 = sand.u32 %s54, 1
        %s314 = smul.addr %s313, 4
        %s315 = scalar_lea.vmem [#allocation6], %s314
        %p316 = scmp.lt.s32.totalorder %s20, 1
        %s317 = scalar_select %p316, %s20, 1
        %s318 = scalar_lea.vmem %s2, %s317
        // Predicated region
        $region29: #{tpu_custom_call.1} parent=23 // pred_check
          %p319 = pneg %p64
        $region30: #{tpu_custom_call.1} parent=23 // pred_check_branch
          %321 = sbr.rel (%p319) target = $region32
        $region31: #{tpu_custom_call.1} parent=23 // pred_region
          %s323 = ssub.s32 64, 64
          %324 = vsyncadd %s312, %s323
          %s325 = smul.addr %s20, 2
          %s326 = smul.addr %s325, 32
          %s327 = scalar_lea.hbm %s1, %s326
          %s328 = sshll.u32 %s315, 4
          %s329 = int_to_ptr.vmem [resolvable:$true] %s328
          %334 = dma.vmem_to_hbm [thread:$0]  %s329, 64, %s327, %s312, 32, 32, 2
        $region32: #{tpu_custom_call.1} parent=23 // pred_fallthru
          _
        // Predicated region
        $region33: #{tpu_custom_call.1} parent=23 // pred_check
          %p335 = pneg %p90
        $region34: #{tpu_custom_call.1} parent=23 // pred_check_branch
          %337 = sbr.rel (%p335) target = $region36
        $region35: #{tpu_custom_call.1} parent=23 // pred_region
          _
        $region36: #{tpu_custom_call.1} parent=23 // pred_fallthru
          _
      $region24: #{tpu_custom_call.1} parent=5 // pred_fallthru
        _
      %p338 = scmp.le.s32.totalorder 2, %s15
      // Predicated region
      $region37: #{tpu_custom_call.1} parent=5 // pred_check
        %p339 = pneg %p338
      $region38: #{tpu_custom_call.1} parent=5 // pred_check_branch
        %341 = sbr.rel (%p339) target = $region40
      $region39: #{tpu_custom_call.1} parent=5 // pred_region
        %s342 = ssub.s32 %s15, 2
        // Predicated region
        $region41: #{tpu_custom_call.1} parent=39 // pred_check
          %p343 = pneg %p70
        $region42: #{tpu_custom_call.1} parent=39 // pred_check_branch
          %345 = sbr.rel (%p343) target = $region44
        $region43: #{tpu_custom_call.1} parent=39 // pred_region
          %s346 = sand.u32 %s55, 1
          %s347 = scalar_lea.sflag [#allocation5], %s346
          %s348 = sand.u32 %s55, 1
          %s349 = smul.addr %s348, 4
          %s350 = scalar_lea.vmem [#allocation6], %s349
          %351 = dma.done %s347, 64
        $region44: #{tpu_custom_call.1} parent=39 // pred_fallthru
          _
        // Predicated region
        $region45: #{tpu_custom_call.1} parent=39 // pred_check
          %p352 = pneg %p96
        $region46: #{tpu_custom_call.1} parent=39 // pred_check_branch
          %354 = sbr.rel (%p352) target = $region48
        $region47: #{tpu_custom_call.1} parent=39 // pred_region
          %p355 = scmp.lt.s32.totalorder %s21, 1
          %s356 = scalar_select %p355, %s21, 1
          %s357 = scalar_lea.vmem %s2, %s356
        $region48: #{tpu_custom_call.1} parent=39 // pred_fallthru
          _
      $region40: #{tpu_custom_call.1} parent=5 // pred_fallthru
        _
    $region6: #{tpu_custom_call.1} parent=1 // loop_footer
      %s19 = sadd.s32 1, %s15
    $region7: #{tpu_custom_call.1} parent=1 // loop_footer_branch
      %14 = sbr.rel target = $region3
    $region8: #{tpu_custom_call.1} parent=1 // loop_exit
      _
    %358 = vsyncpa [#allocation4], 1
    %s359 = scalar_lea.sflag [#allocation4], 1
    %360 = vsyncpa %s359, 1
    %361 = vsyncpa [#allocation5], 1
    %s362 = scalar_lea.sflag [#allocation5], 1
    %363 = vsyncpa %s362, 1

</llo_original>
